<compile_context>
chip_gen: v6e
topology: v6e:2x2x1
jax: 0.10.0
libtpu: 0.0.40
codegen_flags: <defaults>
</compile_context>

<pallas_src>
import jax
import jax.numpy as jnp
from jax.experimental import pallas as pl
from jax.experimental.pallas import tpu as pltpu


def _mlp_kernel(x_ref, wg_ref, wu_ref, wd_ref, o_ref, acc_ref):
    # x_ref  : (tm, hidden)   input token tile
    # wg_ref : (hidden, tf)   gate-projection weight tile (view into fused W)
    # wu_ref : (hidden, tf)   up-projection weight tile   (view into fused W)
    # wd_ref : (tf, hidden)   down-projection weight tile
    # o_ref  : (tm, hidden)   output tile (written on last ffn step)
    # acc_ref: (tm, hidden)   f32 accumulator, persistent across ffn steps
    f = pl.program_id(1)

    @pl.when(f == 0)
    def _():
        acc_ref[...] = jnp.zeros_like(acc_ref)

    x = x_ref[...]
    gate = jnp.dot(x, wg_ref[...], preferred_element_type=jnp.float32)
    up = jnp.dot(x, wu_ref[...], preferred_element_type=jnp.float32)
    # SiluAndMul: silu(gate) * up  (sigmoid lowers to the EUP slot).
    act = (gate * jax.nn.sigmoid(gate)) * up
    acc_ref[...] += jnp.dot(
        act.astype(wd_ref.dtype), wd_ref[...], preferred_element_type=jnp.float32
    )

    @pl.when(f == pl.num_programs(1) - 1)
    def _():
        o_ref[...] = acc_ref[...].astype(o_ref.dtype)


def _round_up(a, b):
    return (a + b - 1) // b * b


def _vmem_capacity_bytes():
    try:
        return int(pltpu.get_tpu_info().vmem_capacity_bytes)
    except Exception:
        return 64 * 1024 * 1024  # conservative (v7x physical VMEM)


def _working_set_bytes(tm, tf, hidden, itemsize):
    # Double-buffered pipelined inputs/outputs + persistent f32 accumulator.
    x_t = 2 * tm * hidden * itemsize
    wg_t = 2 * hidden * tf * itemsize
    wu_t = 2 * hidden * tf * itemsize
    wd_t = 2 * tf * hidden * itemsize
    o_t = 2 * tm * hidden * itemsize
    acc = tm * hidden * 4
    return x_t + wg_t + wu_t + wd_t + o_t + acc


def _pick_tf(ffn, max_tf):
    """Largest multiple of 128 (<= max_tf) that divides ffn, else None."""
    cand = (max_tf // 128) * 128
    while cand >= 128:
        if ffn % cand == 0:
            return cand
        cand -= 128
    return None


def mlp_forward(x, w_gate_up, w_down, *, max_tm=512, max_tf=512):
    """Pallas equivalent of MLP.forward.

    x:          (..., hidden)
    w_gate_up:  (hidden, 2*ffn)  -- [gate | up] concatenated on the last axis
    w_down:     (ffn, hidden)
    """
    orig_shape = x.shape
    hidden = x.shape[-1]
    ffn = w_down.shape[0]
    assert w_gate_up.shape == (hidden, 2 * ffn)
    assert w_down.shape == (ffn, hidden)

    x2 = x.reshape(-1, hidden)
    n = x2.shape[0]
    itemsize = jnp.dtype(x.dtype).itemsize

    vmem_cap = _vmem_capacity_bytes()
    budget = int(vmem_cap * 0.75)  # leave headroom for compiler scratch

    # --- ffn tile: lane-aligned divisor of ffn (padding fallback only). -----
    tf = _pick_tf(ffn, max_tf)
    ffn_pad = ffn
    if tf is None:
        # Rare fallback (no multiple of 128 divides ffn): zero-pad ffn.
        # Padded gate columns give silu(0)*up = 0 and padded W_down rows are
        # zero, so the accumulator is untouched by padding.
        tf = 128
        ffn_pad = _round_up(ffn, tf)
        pad = ffn_pad - ffn
        w_gate = jnp.pad(w_gate_up[:, :ffn], ((0, 0), (0, pad)))
        w_up = jnp.pad(w_gate_up[:, ffn:], ((0, 0), (0, pad)))
        w_gate_up = jnp.concatenate([w_gate, w_up], axis=1)
        w_down = jnp.pad(w_down, ((0, pad), (0, 0)))

    # --- token tile: as large as the VMEM budget allows. --------------------
    tm = min(max_tm, _round_up(n, 8))
    tm = max(8, (tm // 8) * 8)
    while tm > 8 and _working_set_bytes(tm, tf, hidden, itemsize) > budget:
        tm = max(8, tm // 2)
    # If still over budget, try a smaller lane-aligned ffn divisor.
    while (_working_set_bytes(tm, tf, hidden, itemsize) > budget and tf > 128):
        smaller = _pick_tf(ffn_pad, tf - 128)
        if smaller is None:
            break
        tf = smaller

    n_pad = _round_up(n, tm)
    if n_pad != n:
        x2 = jnp.pad(x2, ((0, n_pad - n), (0, 0)))

    n_f = ffn_pad // tf
    grid = (n_pad // tm, n_f)

    ws = _working_set_bytes(tm, tf, hidden, itemsize)
    vmem_limit = int(min(vmem_cap, max(int(ws * 1.3) + (4 << 20), 32 << 20)))

    out = pl.pallas_call(
        _mlp_kernel,
        out_shape=jax.ShapeDtypeStruct((n_pad, hidden), x.dtype),
        grid_spec=pltpu.PrefetchScalarGridSpec(
            num_scalar_prefetch=0,
            grid=grid,
            in_specs=[
                # activations
                pl.BlockSpec((tm, hidden), lambda i, f: (i, 0)),
                # gate half of the fused weight: columns [f*tf, (f+1)*tf)
                pl.BlockSpec((hidden, tf), lambda i, f: (0, f)),
                # up half of the fused weight: columns [ffn + f*tf, ...)
                pl.BlockSpec((hidden, tf), lambda i, f, n_f=n_f: (0, n_f + f)),
                # down projection
                pl.BlockSpec((tf, hidden), lambda i, f: (f, 0)),
            ],
            out_specs=pl.BlockSpec((tm, hidden), lambda i, f: (i, 0)),
            scratch_shapes=[pltpu.VMEM((tm, hidden), jnp.float32)],
        ),
        compiler_params=pltpu.CompilerParams(
            # Token tiles are independent -> "parallel" (megacore sharding);
            # the ffn axis is the accumulation/reduction axis -> "arbitrary".
            dimension_semantics=("parallel", "arbitrary"),
            vmem_limit_bytes=vmem_limit,
        ),
    )(x2, w_gate_up, w_gate_up, w_down)

    if n_pad != n:
        out = out[:n]
    return out.reshape(orig_shape)


if __name__ == "__main__":
    # Small, deterministic synthetic config.
    batch, seq = 2, 8
    hidden_size = 128
    ffn_hidden_size = 512
    dtype = jnp.bfloat16

    key = jax.random.PRNGKey(0)
    kx, kgu, kd = jax.random.split(key, 3)

    x = (jax.random.normal(kx, (batch, seq, hidden_size), jnp.float32) * 0.5).astype(dtype)
    w_gate_up = (
        jax.random.normal(kgu, (hidden_size, 2 * ffn_hidden_size), jnp.float32)
        * (1.0 / hidden_size ** 0.5)
    ).astype(dtype)
    w_down = (
        jax.random.normal(kd, (ffn_hidden_size, hidden_size), jnp.float32)
        * (1.0 / ffn_hidden_size ** 0.5)
    ).astype(dtype)

    # Reference: plain JAX with the same numerics path (bf16 matmuls, f32 accum).
    x2 = x.reshape(-1, hidden_size)
    gate = jnp.dot(x2, w_gate_up[:, :ffn_hidden_size], preferred_element_type=jnp.float32)
    up = jnp.dot(x2, w_gate_up[:, ffn_hidden_size:], preferred_element_type=jnp.float32)
    act = (jax.nn.silu(gate) * up).astype(dtype)
    ref = jnp.dot(act, w_down, preferred_element_type=jnp.float32).astype(dtype)
    ref = ref.reshape(batch, seq, hidden_size)

    # 1) Default (auto-sized) tiles: single token tile, full-ffn-divisor tf.
    out_default = mlp_forward(x, w_gate_up, w_down)
    out_default = jax.block_until_ready(out_default)

    # 2) Small forced tiles to exercise multi-step accumulation + token tiling.
    out_tiled = mlp_forward(x, w_gate_up, w_down, max_tm=8, max_tf=128)
    out_tiled = jax.block_until_ready(out_tiled)

    for out in (out_default, out_tiled):
        assert out.shape == (batch, seq, hidden_size)
        assert out.dtype == dtype
        err = float(jnp.max(jnp.abs(out.astype(jnp.float32) - ref.astype(jnp.float32))))
        assert err < 5e-2, f"Pallas MLP mismatch vs reference: max abs err = {err}"

    print("KERNEL_OK")
</pallas_src>

<mosaic_0001>
module attributes {stable_mosaic.version = 11 : i64} {
  func.func @_mlp_kernel(%arg0: i32, %arg1: i32, %arg2: memref<16x128xbf16, #tpu.memory_space<vmem>>, %arg3: memref<128x512xbf16, #tpu.memory_space<vmem>>, %arg4: memref<128x512xbf16, #tpu.memory_space<vmem>>, %arg5: memref<512x128xbf16, #tpu.memory_space<vmem>>, %arg6: memref<16x128xbf16, #tpu.memory_space<vmem>>, %arg7: memref<16x128xf32, #tpu.memory_space<vmem>>) attributes {dimension_semantics = [#tpu.dimension_semantics<parallel>, #tpu.dimension_semantics<arbitrary>], iteration_bounds = array<i64: 1, 1>, scalar_prefetch = 0 : i64, scratch_operands = 1 : i64, tpu.core_type = #tpu.core_type<tc>, window_params = [{transform_indices = @transform_0, window_bounds = array<i64: 16, 128>}, {transform_indices = @transform_1, window_bounds = array<i64: 128, 512>}, {transform_indices = @transform_2, window_bounds = array<i64: 128, 512>}, {transform_indices = @transform_3, window_bounds = array<i64: 512, 128>}, {transform_indices = @transform_4, window_bounds = array<i64: 16, 128>}]} {
    %c0_i32 = arith.constant 0 : i32
    %0 = arith.cmpi eq, %arg1, %c0_i32 : i32
    %1 = arith.extui %0 : i1 to i32
    %c0_i32_0 = arith.constant 0 : i32
    %2 = arith.cmpi ne, %1, %c0_i32_0 : i32
    scf.if %2 {
      %cst_17 = arith.constant 0.000000e+00 : f32
      %24 = vector.broadcast %cst_17 : f32 to vector<16x128xf32>
      %c0_18 = arith.constant 0 : index
      %c0_19 = arith.constant 0 : index
      %25 = vector.load %arg7[%c0_18, %c0_19] : memref<16x128xf32, #tpu.memory_space<vmem>>, vector<16x128xf32>
      tpu.vector_store %arg7[%c0_18, %c0_19], %24 {strides = array<i32>} : memref<16x128xf32, #tpu.memory_space<vmem>>, vector<16x128xf32>,
    } else {
    }
    %c0 = arith.constant 0 : index
    %c0_1 = arith.constant 0 : index
    %3 = vector.load %arg2[%c0, %c0_1] : memref<16x128xbf16, #tpu.memory_space<vmem>>, vector<16x128xbf16>
    %c0_2 = arith.constant 0 : index
    %c0_3 = arith.constant 0 : index
    %4 = vector.load %arg3[%c0_2, %c0_3] : memref<128x512xbf16, #tpu.memory_space<vmem>>, vector<128x512xbf16>
    %cst = arith.constant dense<0.000000e+00> : vector<16x512xf32>
    %5 = tpu.matmul %3, %4, %cst {dimension_numbers = #tpu.dot_dimension_numbers<[1], [0], [0], [1], [0, 0, 1, 1], [], []>} : vector<16x128xbf16>, vector<128x512xbf16>, vector<16x512xf32> -> vector<16x512xf32>
    %c0_4 = arith.constant 0 : index
    %c0_5 = arith.constant 0 : index
    %6 = vector.load %arg4[%c0_4, %c0_5] : memref<128x512xbf16, #tpu.memory_space<vmem>>, vector<128x512xbf16>
    %cst_6 = arith.constant dense<0.000000e+00> : vector<16x512xf32>
    %7 = tpu.matmul %3, %6, %cst_6 {dimension_numbers = #tpu.dot_dimension_numbers<[1], [0], [0], [1], [0, 0, 1, 1], [], []>} : vector<16x128xbf16>, vector<128x512xbf16>, vector<16x512xf32> -> vector<16x512xf32>
    %8 = arith.negf %5 : vector<16x512xf32>
    %9 = math.exp %8 : vector<16x512xf32>
    %cst_7 = arith.constant 1.000000e+00 : f32
    %10 = vector.broadcast %cst_7 : f32 to vector<16x512xf32>
    %11 = arith.addf %10, %9 : vector<16x512xf32>
    %12 = arith.divf %10, %11 : vector<16x512xf32>
    %13 = arith.mulf %5, %12 : vector<16x512xf32>
    %14 = arith.mulf %13, %7 : vector<16x512xf32>
    %c0_8 = arith.constant 0 : index
    %c0_9 = arith.constant 0 : index
    %15 = vector.load %arg7[%c0_8, %c0_9] : memref<16x128xf32, #tpu.memory_space<vmem>>, vector<16x128xf32>
    %16 = arith.truncf %14 : vector<16x512xf32> to vector<16x512xbf16>
    %c0_10 = arith.constant 0 : index
    %c0_11 = arith.constant 0 : index
    %17 = vector.load %arg5[%c0_10, %c0_11] : memref<512x128xbf16, #tpu.memory_space<vmem>>, vector<512x128xbf16>
    %cst_12 = arith.constant dense<0.000000e+00> : vector<16x128xf32>
    %18 = tpu.matmul %16, %17, %cst_12 {dimension_numbers = #tpu.dot_dimension_numbers<[1], [0], [0], [1], [0, 0, 1, 1], [], []>} : vector<16x512xbf16>, vector<512x128xbf16>, vector<16x128xf32> -> vector<16x128xf32>
    %19 = arith.addf %15, %18 : vector<16x128xf32>
    %c0_13 = arith.constant 0 : index
    %c0_14 = arith.constant 0 : index
    %20 = vector.load %arg7[%c0_13, %c0_14] : memref<16x128xf32, #tpu.memory_space<vmem>>, vector<16x128xf32>
    tpu.vector_store %arg7[%c0_13, %c0_14], %19 {strides = array<i32>} : memref<16x128xf32, #tpu.memory_space<vmem>>, vector<16x128xf32>,
    %c0_i32_15 = arith.constant 0 : i32
    %21 = arith.cmpi eq, %arg1, %c0_i32_15 : i32
    %22 = arith.extui %21 : i1 to i32
    %c0_i32_16 = arith.constant 0 : i32
    %23 = arith.cmpi ne, %22, %c0_i32_16 : i32
    scf.if %23 {
      %c0_17 = arith.constant 0 : index
      %c0_18 = arith.constant 0 : index
      %24 = vector.load %arg7[%c0_17, %c0_18] : memref<16x128xf32, #tpu.memory_space<vmem>>, vector<16x128xf32>
      %25 = arith.truncf %24 : vector<16x128xf32> to vector<16x128xbf16>
      %c0_19 = arith.constant 0 : index
      %c0_20 = arith.constant 0 : index
      %26 = vector.load %arg6[%c0_19, %c0_20] : memref<16x128xbf16, #tpu.memory_space<vmem>>, vector<16x128xbf16>
      tpu.vector_store %arg6[%c0_19, %c0_20], %25 {strides = array<i32>} : memref<16x128xbf16, #tpu.memory_space<vmem>>, vector<16x128xbf16>,
    } else {
    }
    return
  }
  func.func @transform_0(%arg0: i32, %arg1: i32) -> (i32, i32) {
    %c0_i32 = arith.constant 0 : i32
    %c0_i32_0 = arith.constant 0 : i32
    return %arg0, %c0_i32 : i32, i32
  }
  func.func @transform_1(%arg0: i32, %arg1: i32) -> (i32, i32) {
    %c0_i32 = arith.constant 0 : i32
    %c0_i32_0 = arith.constant 0 : i32
    return %c0_i32, %arg1 : i32, i32
  }
  func.func @transform_2(%arg0: i32, %arg1: i32) -> (i32, i32) {
    %c1_i32 = arith.constant 1 : i32
    %0 = arith.addi %c1_i32, %arg1 : i32
    %c0_i32 = arith.constant 0 : i32
    %c0_i32_0 = arith.constant 0 : i32
    return %c0_i32, %0 : i32, i32
  }
  func.func @transform_3(%arg0: i32, %arg1: i32) -> (i32, i32) {
    %c0_i32 = arith.constant 0 : i32
    %c0_i32_0 = arith.constant 0 : i32
    return %arg1, %c0_i32 : i32, i32
  }
  func.func @transform_4(%arg0: i32, %arg1: i32) -> (i32, i32) {
    %c0_i32 = arith.constant 0 : i32
    %c0_i32_0 = arith.constant 0 : i32
    return %arg0, %c0_i32 : i32, i32
  }
}

</mosaic_0001>

<llo_original>
// kernel: tpu_custom_call.1
$region0: #{tpu_custom_call.1}
  #allocation0 [shape = 'u32[]', space=smem, size = 0x4, offset = 0x4, fixed_abs, tag = 'smem constant byte address 0x4 - core index']
  #allocation1 [shape = 'u32[144,128]{1,0:T(1,128)}', space=vmem, size = 0x12000, scoped, tag = 'internal scratch']
  #allocation2 [shape = 'f32[16,128]{1,0:T(8,128)}', space=vmem, size = 0x2000, scoped, tag = 'scratch operand']
  %s0 = inlined_call_operand.hbm [shape: bf16[16,128], index: 0, kind: input, shape index: {}]
  %s1 = inlined_call_operand.hbm [shape: bf16[128,1024], index: 1, kind: input, shape index: {}]
  %s2 = inlined_call_operand.hbm [shape: bf16[128,1024], index: 2, kind: input, shape index: {}]
  %s3 = inlined_call_operand.hbm [shape: bf16[512,128], index: 3, kind: input, shape index: {}]
  %s4 = inlined_call_operand.hbm [shape: bf16[16,128], index: 4, kind: output, shape index: {}]
  %s5 = sld [smem:[#allocation0]]
  $region50: #{tpu_custom_call.1} parent=0
    _
  %s7 = ssub.s32 1, %s5
  %s8 = scalar_select 0, %s7, %s5
  $region1: #{tpu_custom_call.1} parent=0
    #allocation3 [shape = 'u8[4096]{0}', space=vmem, size = 0x1000, scoped, tag = 'input window, operand 0, single buffered']
    #allocation4 [shape = 's32[1]{0}', space=sflag, size = 0x4, scoped, tag = 'scoped memory for tpu_custom_call.1']
    #allocation5 [shape = 's32[1]{0}', space=sflag, size = 0x4, scoped, tag = 'scoped memory for tpu_custom_call.1']
    #allocation6 [shape = 'u8[131072]{0}', space=vmem, size = 0x20000, scoped, tag = 'input window, operand 1, single buffered']
    #allocation7 [shape = 's32[1]{0}', space=sflag, size = 0x4, scoped, tag = 'scoped memory for tpu_custom_call.1']
    #allocation8 [shape = 'u8[131072]{0}', space=vmem, size = 0x20000, scoped, tag = 'input window, operand 2, single buffered']
    #allocation9 [shape = 'u8[131072]{0}', space=vmem, size = 0x20000, scoped, tag = 'input window, operand 3, single buffered']
    #allocation10 [shape = 's32[1]{0}', space=sflag, size = 0x4, scoped, tag = 'scoped memory for tpu_custom_call.1']
    #allocation11 [shape = 'u8[4096]{0}', space=vmem, size = 0x1000, scoped, tag = 'output window, operand 0, single buffered']
    %9 = vsyncpa [#allocation4], 0
    %10 = vsyncpa [#allocation7], 0
    %11 = vsyncpa [#allocation10], 0
    %12 = vsyncpa [#allocation5], 0
    // Predicated region
    $region2: #{tpu_custom_call.1} parent=1 // pred_check
      _
    $region3: #{tpu_custom_call.1} parent=1 // pred_check_branch
      %14 = sbr.rel (0) target = $region5
    $region4: #{tpu_custom_call.1} parent=1 // pred_region
      %s16 = ssub.s32 128, 128
      %17 = vsyncadd [#allocation4], %s16
      %s18 = sshll.u32 [#allocation3], 4
      %s19 = int_to_ptr.vmem [resolvable:$true] %s18
      %24 = dma.hbm_to_vmem [thread:$0]  %s0, 128, %s19, [#allocation4], 64, 64, 4
    $region5: #{tpu_custom_call.1} parent=1 // pred_fallthru
      _
    // Predicated region
    $region6: #{tpu_custom_call.1} parent=1 // pred_check
      _
    $region7: #{tpu_custom_call.1} parent=1 // pred_check_branch
      %26 = sbr.rel (0) target = $region9
    $region8: #{tpu_custom_call.1} parent=1 // pred_region
      %s28 = ssub.s32 4096, 4096
      %29 = vsyncadd [#allocation7], %s28
      %s30 = sshll.u32 [#allocation6], 4
      %s31 = int_to_ptr.vmem [resolvable:$true] %s30
      %36 = dma.hbm_to_vmem [thread:$0]  %s1, 4096, %s31, [#allocation7], 512, 256, 16
    $region9: #{tpu_custom_call.1} parent=1 // pred_fallthru
      _
    // Predicated region
    $region10: #{tpu_custom_call.1} parent=1 // pred_check
      _
    $region11: #{tpu_custom_call.1} parent=1 // pred_check_branch
      %38 = sbr.rel (0) target = $region13
    $region12: #{tpu_custom_call.1} parent=1 // pred_region
      %s39 = sadd.s32 0, 1
      %s40 = smul.u32 4, %s39
      %s42 = ssub.s32 4096, 4096
      %43 = vsyncadd [#allocation7], %s42
      %s44 = smul.addr %s40, 64
      %s45 = scalar_lea.hbm %s2, %s44
      %s46 = sshll.u32 [#allocation8], 4
      %s47 = int_to_ptr.vmem [resolvable:$true] %s46
      %52 = dma.hbm_to_vmem [thread:$0]  %s45, 4096, %s47, [#allocation7], 512, 256, 16
    $region13: #{tpu_custom_call.1} parent=1 // pred_fallthru
      _
    // Predicated region
    $region14: #{tpu_custom_call.1} parent=1 // pred_check
      _
    $region15: #{tpu_custom_call.1} parent=1 // pred_check_branch
      %54 = sbr.rel (0) target = $region17
    $region16: #{tpu_custom_call.1} parent=1 // pred_region
      %s56 = ssub.s32 4096, 4096
      %57 = vsyncadd [#allocation10], %s56
      %s58 = sshll.u32 [#allocation9], 4
      %s59 = int_to_ptr.vmem [resolvable:$true] %s58
      %64 = dma.hbm_to_vmem [thread:$0]  %s3, 4096, %s59, [#allocation10], 64, 64, 4
    $region17: #{tpu_custom_call.1} parent=1 // pred_fallthru
      _
    // Predicated region
    $region18: #{tpu_custom_call.1} parent=1 // pred_check
      _
    $region19: #{tpu_custom_call.1} parent=1 // pred_check_branch
      %66 = sbr.rel (0) target = $region21
    $region20: #{tpu_custom_call.1} parent=1 // pred_region
      %67 = dma.done [#allocation4], 128
    $region21: #{tpu_custom_call.1} parent=1 // pred_fallthru
      _
    // Predicated region
    $region22: #{tpu_custom_call.1} parent=1 // pred_check
      _
    $region23: #{tpu_custom_call.1} parent=1 // pred_check_branch
      %69 = sbr.rel (0) target = $region25
    $region24: #{tpu_custom_call.1} parent=1 // pred_region
      %70 = dma.done [#allocation7], 4096
    $region25: #{tpu_custom_call.1} parent=1 // pred_fallthru
      _
    // Predicated region
    $region26: #{tpu_custom_call.1} parent=1 // pred_check
      _
    $region27: #{tpu_custom_call.1} parent=1 // pred_check_branch
      %72 = sbr.rel (0) target = $region29
    $region28: #{tpu_custom_call.1} parent=1 // pred_region
      %73 = dma.done [#allocation7], 4096
    $region29: #{tpu_custom_call.1} parent=1 // pred_fallthru
      _
    // Predicated region
    $region30: #{tpu_custom_call.1} parent=1 // pred_check
      _
    $region31: #{tpu_custom_call.1} parent=1 // pred_check_branch
      %75 = sbr.rel (0) target = $region33
    $region32: #{tpu_custom_call.1} parent=1 // pred_region
      %76 = dma.done [#allocation10], 4096
    $region33: #{tpu_custom_call.1} parent=1 // pred_fallthru
      _
    %s77 = sadd.s32 0, 1
    %s78 = smul.u32 4, %s77
    %p80 = scmp.eq.s32.totalorder 0, 0
    // Predicated region
    $region34: #{tpu_custom_call.1} parent=1 // pred_check
      %p81 = pneg %p80
    $region35: #{tpu_custom_call.1} parent=1 // pred_check_branch
      %83 = sbr.rel (%p81) target = $region37
    $region36: #{tpu_custom_call.1} parent=1 // pred_region
      %84 = vst [vmem:[#allocation2] sm:$0xff] 0.0
      %85 = vst [vmem:[#allocation2 + $0x8] sm:$0xff] 0.0
    $region37: #{tpu_custom_call.1} parent=1 // pred_fallthru
      _
    %v86 = vld [vmem:[#allocation3] sm:$0xf]
    %v87 = vld [vmem:[#allocation3 + $0x4] sm:$0xf]
    %v88 = vld [vmem:[#allocation6] sm:$0xff]
    %v89 = vld [vmem:[#allocation6 + $0x8] sm:$0xff]
    %v90 = vld [vmem:[#allocation6 + $0x10] sm:$0xff]
    %v91 = vld [vmem:[#allocation6 + $0x18] sm:$0xff]
    %v92 = vld [vmem:[#allocation6 + $0x20] sm:$0xff]
    %v93 = vld [vmem:[#allocation6 + $0x28] sm:$0xff]
    %v94 = vld [vmem:[#allocation6 + $0x30] sm:$0xff]
    %v95 = vld [vmem:[#allocation6 + $0x38] sm:$0xff]
    %v96 = vld [vmem:[#allocation6 + $0x40] sm:$0xff]
    %v97 = vld [vmem:[#allocation6 + $0x48] sm:$0xff]
    %v98 = vld [vmem:[#allocation6 + $0x50] sm:$0xff]
    %v99 = vld [vmem:[#allocation6 + $0x58] sm:$0xff]
    %v100 = vld [vmem:[#allocation6 + $0x60] sm:$0xff]
    %v101 = vld [vmem:[#allocation6 + $0x68] sm:$0xff]
    %v102 = vld [vmem:[#allocation6 + $0x70] sm:$0xff]
    %v103 = vld [vmem:[#allocation6 + $0x78] sm:$0xff]
    %v104 = vld [vmem:[#allocation6 + $0x80] sm:$0xff]
    %v105 = vld [vmem:[#allocation6 + $0x88] sm:$0xff]
    %v106 = vld [vmem:[#allocation6 + $0x90] sm:$0xff]
    %v107 = vld [vmem:[#allocation6 + $0x98] sm:$0xff]
    %v108 = vld [vmem:[#allocation6 + $0xa0] sm:$0xff]
    %v109 = vld [vmem:[#allocation6 + $0xa8] sm:$0xff]
    %v110 = vld [vmem:[#allocation6 + $0xb0] sm:$0xff]
    %v111 = vld [vmem:[#allocation6 + $0xb8] sm:$0xff]
    %v112 = vld [vmem:[#allocation6 + $0xc0] sm:$0xff]
    %v113 = vld [vmem:[#allocation6 + $0xc8] sm:$0xff]
    %v114 = vld [vmem:[#allocation6 + $0xd0] sm:$0xff]
    %v115 = vld [vmem:[#allocation6 + $0xd8] sm:$0xff]
    %v116 = vld [vmem:[#allocation6 + $0xe0] sm:$0xff]
    %v117 = vld [vmem:[#allocation6 + $0xe8] sm:$0xff]
    %v118 = vld [vmem:[#allocation6 + $0xf0] sm:$0xff]
    %v119 = vld [vmem:[#allocation6 + $0xf8] sm:$0xff]
    %v122 = vunpack.c.l.b16 %v86
    %v123 = vunpack.c.l.b16 %v87
    %v124 = vpack.c.b16 %v123, %v122
    %v158 = vunpack.c.l.b16 %v88
    %v159 = vunpack.c.h.b16 %v88
    %v160 = vunpack.c.l.b16 %v89
    %v161 = vunpack.c.h.b16 %v89
    %v162 = vunpack.c.l.b16 %v90
    %v163 = vunpack.c.h.b16 %v90
    %v164 = vunpack.c.l.b16 %v91
    %v165 = vunpack.c.h.b16 %v91
    %v166 = vunpack.c.l.b16 %v92
    %v167 = vunpack.c.h.b16 %v92
    %v168 = vunpack.c.l.b16 %v93
    %v169 = vunpack.c.h.b16 %v93
    %v170 = vunpack.c.l.b16 %v94
    %v171 = vunpack.c.h.b16 %v94
    %v172 = vunpack.c.l.b16 %v95
    %v173 = vunpack.c.h.b16 %v95
    %v174 = vunpack.c.l.b16 %v96
    %v175 = vunpack.c.h.b16 %v96
    %v176 = vunpack.c.l.b16 %v97
    %v177 = vunpack.c.h.b16 %v97
    %v178 = vunpack.c.l.b16 %v98
    %v179 = vunpack.c.h.b16 %v98
    %v180 = vunpack.c.l.b16 %v99
    %v181 = vunpack.c.h.b16 %v99
    %v182 = vunpack.c.l.b16 %v100
    %v183 = vunpack.c.h.b16 %v100
    %v184 = vunpack.c.l.b16 %v101
    %v185 = vunpack.c.h.b16 %v101
    %v186 = vunpack.c.l.b16 %v102
    %v187 = vunpack.c.h.b16 %v102
    %v188 = vunpack.c.l.b16 %v103
    %v189 = vunpack.c.h.b16 %v103
    %v190 = vunpack.c.l.b16 %v104
    %v191 = vunpack.c.h.b16 %v104
    %v192 = vunpack.c.l.b16 %v105
    %v193 = vunpack.c.h.b16 %v105
    %v194 = vunpack.c.l.b16 %v106
    %v195 = vunpack.c.h.b16 %v106
    %v196 = vunpack.c.l.b16 %v107
    %v197 = vunpack.c.h.b16 %v107
    %v198 = vunpack.c.l.b16 %v108
    %v199 = vunpack.c.h.b16 %v108
    %v200 = vunpack.c.l.b16 %v109
    %v201 = vunpack.c.h.b16 %v109
    %v202 = vunpack.c.l.b16 %v110
    %v203 = vunpack.c.h.b16 %v110
    %v204 = vunpack.c.l.b16 %v111
    %v205 = vunpack.c.h.b16 %v111
    %v206 = vunpack.c.l.b16 %v112
    %v207 = vunpack.c.h.b16 %v112
    %v208 = vunpack.c.l.b16 %v113
    %v209 = vunpack.c.h.b16 %v113
    %v210 = vunpack.c.l.b16 %v114
    %v211 = vunpack.c.h.b16 %v114
    %v212 = vunpack.c.l.b16 %v115
    %v213 = vunpack.c.h.b16 %v115
    %v214 = vunpack.c.l.b16 %v116
    %v215 = vunpack.c.h.b16 %v116
    %v216 = vunpack.c.l.b16 %v117
    %v217 = vunpack.c.h.b16 %v117
    %v218 = vunpack.c.l.b16 %v118
    %v219 = vunpack.c.h.b16 %v118
    %v220 = vunpack.c.l.b16 %v119
    %v221 = vunpack.c.h.b16 %v119
    %v222 = vpack.c.b16 %v162, %v158
    %v223 = vpack.c.b16 %v163, %v159
    %v224 = vpack.c.b16 %v164, %v160
    %v225 = vpack.c.b16 %v165, %v161
    %v226 = vpack.c.b16 %v170, %v166
    %v227 = vpack.c.b16 %v171, %v167
    %v228 = vpack.c.b16 %v172, %v168
    %v229 = vpack.c.b16 %v173, %v169
    %v230 = vpack.c.b16 %v178, %v174
    %v231 = vpack.c.b16 %v179, %v175
    %v232 = vpack.c.b16 %v180, %v176
    %v233 = vpack.c.b16 %v181, %v177
    %v234 = vpack.c.b16 %v186, %v182
    %v235 = vpack.c.b16 %v187, %v183
    %v236 = vpack.c.b16 %v188, %v184
    %v237 = vpack.c.b16 %v189, %v185
    %v238 = vpack.c.b16 %v194, %v190
    %v239 = vpack.c.b16 %v195, %v191
    %v240 = vpack.c.b16 %v196, %v192
    %v241 = vpack.c.b16 %v197, %v193
    %v242 = vpack.c.b16 %v202, %v198
    %v243 = vpack.c.b16 %v203, %v199
    %v244 = vpack.c.b16 %v204, %v200
    %v245 = vpack.c.b16 %v205, %v201
    %v246 = vpack.c.b16 %v210, %v206
    %v247 = vpack.c.b16 %v211, %v207
    %v248 = vpack.c.b16 %v212, %v208
    %v249 = vpack.c.b16 %v213, %v209
    %v250 = vpack.c.b16 %v218, %v214
    %v251 = vpack.c.b16 %v219, %v215
    %v252 = vpack.c.b16 %v220, %v216
    %v253 = vpack.c.b16 %v221, %v217
    %286 = vmatprep.subr.bf16.mxu0 %v251
    %287 = vmatpush1.bf16.msra.mxu0 %v250
    %288 = vmatprep.subr.bf16.mxu0 %v247
    %289 = vmatpush1.bf16.msra.mxu0 %v246
    %290 = vmatprep.subr.bf16.mxu0 %v243
    %291 = vmatpush1.bf16.msra.mxu0 %v242
    %292 = vmatprep.subr.bf16.mxu0 %v239
    %293 = vmatpush1.bf16.msra.mxu0 %v238
    %294 = vmatprep.subr.bf16.mxu0 %v235
    %295 = vmatpush1.bf16.msra.mxu0 %v234
    %296 = vmatprep.subr.bf16.mxu0 %v231
    %297 = vmatpush1.bf16.msra.mxu0 %v230
    %298 = vmatprep.subr.bf16.mxu0 %v227
    %299 = vmatpush1.bf16.msra.mxu0 %v226
    %300 = vmatprep.subr.bf16.mxu0 %v223
    %301 = vmatpush1.bf16.msra.mxu0 %v222
    %302 = vmatprep.subr.bf16.mxu0 0
    %303 = vmatpush2.bf16.msra.mxu0 0
    %304 = vmatprep.subr.bf16.mxu0 0
    %305 = vmatpush2.bf16.msra.mxu0 0
    %306 = vmatprep.subr.bf16.mxu0 0
    %307 = vmatpush2.bf16.msra.mxu0 0
    %308 = vmatprep.subr.bf16.mxu0 0
    %309 = vmatpush2.bf16.msra.mxu0 0
    %310 = vmatprep.subr.bf16.mxu0 0
    %311 = vmatpush2.bf16.msra.mxu0 0
    %312 = vmatprep.subr.bf16.mxu0 0
    %313 = vmatpush2.bf16.msra.mxu0 0
    %314 = vmatprep.subr.bf16.mxu0 0
    %315 = vmatpush2.bf16.msra.mxu0 0
    %316 = vmatprep.subr.bf16.mxu0 0
    %317 = vmatpush2.bf16.msra.mxu0 0
    %318 = vmatprep.mubr.bf16.mxu0 0
    %319 = vmatmul.mubr.bf16.gmra.mxu0 %v124
    %v320 = vpop.f32.mrf.mxu0
    %v321 = vadd.f32 0.0, %v320
    %v322 = vpop.f32.mrf.mxu0
    %v323 = vadd.f32 0.0, %v322
    %v324 = vpop.f32.mrf.mxu0
    %v325 = vadd.f32 0.0, %v324
    %v326 = vpop.f32.mrf.mxu0
    %v327 = vadd.f32 0.0, %v326
    %328 = vdwg.mxu0
    %329 = vmatprep.subr.bf16.mxu0 %v253
    %330 = vmatpush1.bf16.msra.mxu0 %v252
    %331 = vmatprep.subr.bf16.mxu0 %v249
    %332 = vmatpush1.bf16.msra.mxu0 %v248
    %333 = vmatprep.subr.bf16.mxu0 %v245
    %334 = vmatpush1.bf16.msra.mxu0 %v244
    %335 = vmatprep.subr.bf16.mxu0 %v241
    %336 = vmatpush1.bf16.msra.mxu0 %v240
    %337 = vmatprep.subr.bf16.mxu0 %v237
    %338 = vmatpush1.bf16.msra.mxu0 %v236
    %339 = vmatprep.subr.bf16.mxu0 %v233
    %340 = vmatpush1.bf16.msra.mxu0 %v232
    %341 = vmatprep.subr.bf16.mxu0 %v229
    %342 = vmatpush1.bf16.msra.mxu0 %v228
    %343 = vmatprep.subr.bf16.mxu0 %v225
    %344 = vmatpush1.bf16.msra.mxu0 %v224
    %345 = vmatprep.subr.bf16.mxu0 0
    %346 = vmatpush2.bf16.msra.mxu0 0
    %347 = vmatprep.subr.bf16.mxu0 0
    %348 = vmatpush2.bf16.msra.mxu0 0
    %349 = vmatprep.subr.bf16.mxu0 0
    %350 = vmatpush2.bf16.msra.mxu0 0
    %351 = vmatprep.subr.bf16.mxu0 0
    %352 = vmatpush2.bf16.msra.mxu0 0
    %353 = vmatprep.subr.bf16.mxu0 0
    %354 = vmatpush2.bf16.msra.mxu0 0
    %355 = vmatprep.subr.bf16.mxu0 0
    %356 = vmatpush2.bf16.msra.mxu0 0
    %357 = vmatprep.subr.bf16.mxu0 0
    %358 = vmatpush2.bf16.msra.mxu0 0
    %359 = vmatprep.subr.bf16.mxu0 0
    %360 = vmatpush2.bf16.msra.mxu0 0
    %361 = vmatprep.mubr.bf16.mxu0 0
    %362 = vmatmul.mubr.bf16.gmra.mxu0 %v124
    %v363 = vpop.f32.mrf.mxu0
    %v364 = vadd.f32 0.0, %v363
    %v365 = vpop.f32.mrf.mxu0
    %v366 = vadd.f32 0.0, %v365
    %v367 = vpop.f32.mrf.mxu0
    %v368 = vadd.f32 0.0, %v367
    %v369 = vpop.f32.mrf.mxu0
    %v370 = vadd.f32 0.0, %v369
    %371 = vdwg.mxu0
    %v372 = vld [vmem:[#allocation8] sm:$0xff]
    %v373 = vld [vmem:[#allocation8 + $0x8] sm:$0xff]
    %v374 = vld [vmem:[#allocation8 + $0x10] sm:$0xff]
    %v375 = vld [vmem:[#allocation8 + $0x18] sm:$0xff]
    %v376 = vld [vmem:[#allocation8 + $0x20] sm:$0xff]
    %v377 = vld [vmem:[#allocation8 + $0x28] sm:$0xff]
    %v378 = vld [vmem:[#allocation8 + $0x30] sm:$0xff]
    %v379 = vld [vmem:[#allocation8 + $0x38] sm:$0xff]
    %v380 = vld [vmem:[#allocation8 + $0x40] sm:$0xff]
    %v381 = vld [vmem:[#allocation8 + $0x48] sm:$0xff]
    %v382 = vld [vmem:[#allocation8 + $0x50] sm:$0xff]
    %v383 = vld [vmem:[#allocation8 + $0x58] sm:$0xff]
    %v384 = vld [vmem:[#allocation8 + $0x60] sm:$0xff]
    %v385 = vld [vmem:[#allocation8 + $0x68] sm:$0xff]
    %v386 = vld [vmem:[#allocation8 + $0x70] sm:$0xff]
    %v387 = vld [vmem:[#allocation8 + $0x78] sm:$0xff]
    %v388 = vld [vmem:[#allocation8 + $0x80] sm:$0xff]
    %v389 = vld [vmem:[#allocation8 + $0x88] sm:$0xff]
    %v390 = vld [vmem:[#allocation8 + $0x90] sm:$0xff]
    %v391 = vld [vmem:[#allocation8 + $0x98] sm:$0xff]
    %v392 = vld [vmem:[#allocation8 + $0xa0] sm:$0xff]
    %v393 = vld [vmem:[#allocation8 + $0xa8] sm:$0xff]
    %v394 = vld [vmem:[#allocation8 + $0xb0] sm:$0xff]
    %v395 = vld [vmem:[#allocation8 + $0xb8] sm:$0xff]
    %v396 = vld [vmem:[#allocation8 + $0xc0] sm:$0xff]
    %v397 = vld [vmem:[#allocation8 + $0xc8] sm:$0xff]
    %v398 = vld [vmem:[#allocation8 + $0xd0] sm:$0xff]
    %v399 = vld [vmem:[#allocation8 + $0xd8] sm:$0xff]
    %v400 = vld [vmem:[#allocation8 + $0xe0] sm:$0xff]
    %v401 = vld [vmem:[#allocation8 + $0xe8] sm:$0xff]
    %v402 = vld [vmem:[#allocation8 + $0xf0] sm:$0xff]
    %v403 = vld [vmem:[#allocation8 + $0xf8] sm:$0xff]
    %v436 = vunpack.c.l.b16 %v372
    %v437 = vunpack.c.h.b16 %v372
    %v438 = vunpack.c.l.b16 %v373
    %v439 = vunpack.c.h.b16 %v373
    %v440 = vunpack.c.l.b16 %v374
    %v441 = vunpack.c.h.b16 %v374
    %v442 = vunpack.c.l.b16 %v375
    %v443 = vunpack.c.h.b16 %v375
    %v444 = vunpack.c.l.b16 %v376
    %v445 = vunpack.c.h.b16 %v376
    %v446 = vunpack.c.l.b16 %v377
    %v447 = vunpack.c.h.b16 %v377
    %v448 = vunpack.c.l.b16 %v378
    %v449 = vunpack.c.h.b16 %v378
    %v450 = vunpack.c.l.b16 %v379
    %v451 = vunpack.c.h.b16 %v379
    %v452 = vunpack.c.l.b16 %v380
    %v453 = vunpack.c.h.b16 %v380
    %v454 = vunpack.c.l.b16 %v381
    %v455 = vunpack.c.h.b16 %v381
    %v456 = vunpack.c.l.b16 %v382
    %v457 = vunpack.c.h.b16 %v382
    %v458 = vunpack.c.l.b16 %v383
    %v459 = vunpack.c.h.b16 %v383
    %v460 = vunpack.c.l.b16 %v384
    %v461 = vunpack.c.h.b16 %v384
    %v462 = vunpack.c.l.b16 %v385
    %v463 = vunpack.c.h.b16 %v385
    %v464 = vunpack.c.l.b16 %v386
    %v465 = vunpack.c.h.b16 %v386
    %v466 = vunpack.c.l.b16 %v387
    %v467 = vunpack.c.h.b16 %v387
    %v468 = vunpack.c.l.b16 %v388
    %v469 = vunpack.c.h.b16 %v388
    %v470 = vunpack.c.l.b16 %v389
    %v471 = vunpack.c.h.b16 %v389
    %v472 = vunpack.c.l.b16 %v390
    %v473 = vunpack.c.h.b16 %v390
    %v474 = vunpack.c.l.b16 %v391
    %v475 = vunpack.c.h.b16 %v391
    %v476 = vunpack.c.l.b16 %v392
    %v477 = vunpack.c.h.b16 %v392
    %v478 = vunpack.c.l.b16 %v393
    %v479 = vunpack.c.h.b16 %v393
    %v480 = vunpack.c.l.b16 %v394
    %v481 = vunpack.c.h.b16 %v394
    %v482 = vunpack.c.l.b16 %v395
    %v483 = vunpack.c.h.b16 %v395
    %v484 = vunpack.c.l.b16 %v396
    %v485 = vunpack.c.h.b16 %v396
    %v486 = vunpack.c.l.b16 %v397
    %v487 = vunpack.c.h.b16 %v397
    %v488 = vunpack.c.l.b16 %v398
    %v489 = vunpack.c.h.b16 %v398
    %v490 = vunpack.c.l.b16 %v399
    %v491 = vunpack.c.h.b16 %v399
    %v492 = vunpack.c.l.b16 %v400
    %v493 = vunpack.c.h.b16 %v400
    %v494 = vunpack.c.l.b16 %v401
    %v495 = vunpack.c.h.b16 %v401
    %v496 = vunpack.c.l.b16 %v402
    %v497 = vunpack.c.h.b16 %v402
    %v498 = vunpack.c.l.b16 %v403
    %v499 = vunpack.c.h.b16 %v403
    %v500 = vpack.c.b16 %v440, %v436
    %v501 = vpack.c.b16 %v441, %v437
    %v502 = vpack.c.b16 %v442, %v438
    %v503 = vpack.c.b16 %v443, %v439
    %v504 = vpack.c.b16 %v448, %v444
    %v505 = vpack.c.b16 %v449, %v445
    %v506 = vpack.c.b16 %v450, %v446
    %v507 = vpack.c.b16 %v451, %v447
    %v508 = vpack.c.b16 %v456, %v452
    %v509 = vpack.c.b16 %v457, %v453
    %v510 = vpack.c.b16 %v458, %v454
    %v511 = vpack.c.b16 %v459, %v455
    %v512 = vpack.c.b16 %v464, %v460
    %v513 = vpack.c.b16 %v465, %v461
    %v514 = vpack.c.b16 %v466, %v462
    %v515 = vpack.c.b16 %v467, %v463
    %v516 = vpack.c.b16 %v472, %v468
    %v517 = vpack.c.b16 %v473, %v469
    %v518 = vpack.c.b16 %v474, %v470
    %v519 = vpack.c.b16 %v475, %v471
    %v520 = vpack.c.b16 %v480, %v476
    %v521 = vpack.c.b16 %v481, %v477
    %v522 = vpack.c.b16 %v482, %v478
    %v523 = vpack.c.b16 %v483, %v479
    %v524 = vpack.c.b16 %v488, %v484
    %v525 = vpack.c.b16 %v489, %v485
    %v526 = vpack.c.b16 %v490, %v486
    %v527 = vpack.c.b16 %v491, %v487
    %v528 = vpack.c.b16 %v496, %v492
    %v529 = vpack.c.b16 %v497, %v493
    %v530 = vpack.c.b16 %v498, %v494
    %v531 = vpack.c.b16 %v499, %v495
    %564 = vmatprep.subr.bf16.mxu0 %v529
    %565 = vmatpush1.bf16.msra.mxu0 %v528
    %566 = vmatprep.subr.bf16.mxu0 %v525
    %567 = vmatpush1.bf16.msra.mxu0 %v524
    %568 = vmatprep.subr.bf16.mxu0 %v521
    %569 = vmatpush1.bf16.msra.mxu0 %v520
    %570 = vmatprep.subr.bf16.mxu0 %v517
    %571 = vmatpush1.bf16.msra.mxu0 %v516
    %572 = vmatprep.subr.bf16.mxu0 %v513
    %573 = vmatpush1.bf16.msra.mxu0 %v512
    %574 = vmatprep.subr.bf16.mxu0 %v509
    %575 = vmatpush1.bf16.msra.mxu0 %v508
    %576 = vmatprep.subr.bf16.mxu0 %v505
    %577 = vmatpush1.bf16.msra.mxu0 %v504
    %578 = vmatprep.subr.bf16.mxu0 %v501
    %579 = vmatpush1.bf16.msra.mxu0 %v500
    %580 = vmatprep.subr.bf16.mxu0 0
    %581 = vmatpush2.bf16.msra.mxu0 0
    %582 = vmatprep.subr.bf16.mxu0 0
    %583 = vmatpush2.bf16.msra.mxu0 0
    %584 = vmatprep.subr.bf16.mxu0 0
    %585 = vmatpush2.bf16.msra.mxu0 0
    %586 = vmatprep.subr.bf16.mxu0 0
    %587 = vmatpush2.bf16.msra.mxu0 0
    %588 = vmatprep.subr.bf16.mxu0 0
    %589 = vmatpush2.bf16.msra.mxu0 0
    %590 = vmatprep.subr.bf16.mxu0 0
    %591 = vmatpush2.bf16.msra.mxu0 0
    %592 = vmatprep.subr.bf16.mxu0 0
    %593 = vmatpush2.bf16.msra.mxu0 0
    %594 = vmatprep.subr.bf16.mxu0 0
    %595 = vmatpush2.bf16.msra.mxu0 0
    %596 = vmatprep.mubr.bf16.mxu0 0
    %597 = vmatmul.mubr.bf16.gmra.mxu0 %v124
    %v598 = vpop.f32.mrf.mxu0
    %v599 = vadd.f32 0.0, %v598
    %v600 = vpop.f32.mrf.mxu0
    %v601 = vadd.f32 0.0, %v600
    %v602 = vpop.f32.mrf.mxu0
    %v603 = vadd.f32 0.0, %v602
    %v604 = vpop.f32.mrf.mxu0
    %v605 = vadd.f32 0.0, %v604
    %606 = vdwg.mxu0
    %607 = vmatprep.subr.bf16.mxu0 %v531
    %608 = vmatpush1.bf16.msra.mxu0 %v530
    %609 = vmatprep.subr.bf16.mxu0 %v527
    %610 = vmatpush1.bf16.msra.mxu0 %v526
    %611 = vmatprep.subr.bf16.mxu0 %v523
    %612 = vmatpush1.bf16.msra.mxu0 %v522
    %613 = vmatprep.subr.bf16.mxu0 %v519
    %614 = vmatpush1.bf16.msra.mxu0 %v518
    %615 = vmatprep.subr.bf16.mxu0 %v515
    %616 = vmatpush1.bf16.msra.mxu0 %v514
    %617 = vmatprep.subr.bf16.mxu0 %v511
    %618 = vmatpush1.bf16.msra.mxu0 %v510
    %619 = vmatprep.subr.bf16.mxu0 %v507
    %620 = vmatpush1.bf16.msra.mxu0 %v506
    %621 = vmatprep.subr.bf16.mxu0 %v503
    %622 = vmatpush1.bf16.msra.mxu0 %v502
    %623 = vmatprep.subr.bf16.mxu0 0
    %624 = vmatpush2.bf16.msra.mxu0 0
    %625 = vmatprep.subr.bf16.mxu0 0
    %626 = vmatpush2.bf16.msra.mxu0 0
    %627 = vmatprep.subr.bf16.mxu0 0
    %628 = vmatpush2.bf16.msra.mxu0 0
    %629 = vmatprep.subr.bf16.mxu0 0
    %630 = vmatpush2.bf16.msra.mxu0 0
    %631 = vmatprep.subr.bf16.mxu0 0
    %632 = vmatpush2.bf16.msra.mxu0 0
    %633 = vmatprep.subr.bf16.mxu0 0
    %634 = vmatpush2.bf16.msra.mxu0 0
    %635 = vmatprep.subr.bf16.mxu0 0
    %636 = vmatpush2.bf16.msra.mxu0 0
    %637 = vmatprep.subr.bf16.mxu0 0
    %638 = vmatpush2.bf16.msra.mxu0 0
    %639 = vmatprep.mubr.bf16.mxu0 0
    %640 = vmatmul.mubr.bf16.gmra.mxu0 %v124
    %v641 = vpop.f32.mrf.mxu0
    %v642 = vadd.f32 0.0, %v641
    %v643 = vpop.f32.mrf.mxu0
    %v644 = vadd.f32 0.0, %v643
    %v645 = vpop.f32.mrf.mxu0
    %v646 = vadd.f32 0.0, %v645
    %v647 = vpop.f32.mrf.mxu0
    %v648 = vadd.f32 0.0, %v647
    %649 = vdwg.mxu0
    %v650 = vxor.u32 %v321, 2147483648
    %v651 = vxor.u32 %v323, 2147483648
    %v652 = vxor.u32 %v364, 2147483648
    %v653 = vxor.u32 %v366, 2147483648
    %v654 = vxor.u32 %v325, 2147483648
    %v655 = vxor.u32 %v327, 2147483648
    %v656 = vxor.u32 %v368, 2147483648
    %v657 = vxor.u32 %v370, 2147483648
    %v658 = vmul.f32 %v650, 1.442695
    %v659 = vpow.pop %v658
    %v660 = vmul.f32 %v651, 1.442695
    %v661 = vpow.pop %v660
    %v662 = vmul.f32 %v652, 1.442695
    %v663 = vpow.pop %v662
    %v664 = vmul.f32 %v653, 1.442695
    %v665 = vpow.pop %v664
    %v666 = vmul.f32 %v654, 1.442695
    %v667 = vpow.pop %v666
    %v668 = vmul.f32 %v655, 1.442695
    %v669 = vpow.pop %v668
    %v670 = vmul.f32 %v656, 1.442695
    %v671 = vpow.pop %v670
    %v672 = vmul.f32 %v657, 1.442695
    %v673 = vpow.pop %v672
    %v674 = vadd.f32 %v659, 1.0
    %v675 = vadd.f32 %v661, 1.0
    %v676 = vadd.f32 %v663, 1.0
    %v677 = vadd.f32 %v665, 1.0
    %v678 = vadd.f32 %v667, 1.0
    %v679 = vadd.f32 %v669, 1.0
    %v680 = vadd.f32 %v671, 1.0
    %v681 = vadd.f32 %v673, 1.0
    %v682 = vrcp.pop %v674
    %v683 = vmul.f32 1.0, %v682
    %v684 = vrcp.pop %v675
    %v685 = vmul.f32 1.0, %v684
    %v686 = vrcp.pop %v676
    %v687 = vmul.f32 1.0, %v686
    %v688 = vrcp.pop %v677
    %v689 = vmul.f32 1.0, %v688
    %v690 = vrcp.pop %v678
    %v691 = vmul.f32 1.0, %v690
    %v692 = vrcp.pop %v679
    %v693 = vmul.f32 1.0, %v692
    %v694 = vrcp.pop %v680
    %v695 = vmul.f32 1.0, %v694
    %v696 = vrcp.pop %v681
    %v697 = vmul.f32 1.0, %v696
    %v698 = vmul.f32 %v321, %v683
    %v699 = vmul.f32 %v323, %v685
    %v700 = vmul.f32 %v364, %v687
    %v701 = vmul.f32 %v366, %v689
    %v702 = vmul.f32 %v325, %v691
    %v703 = vmul.f32 %v327, %v693
    %v704 = vmul.f32 %v368, %v695
    %v705 = vmul.f32 %v370, %v697
    %v706 = vmul.f32 %v698, %v599
    %v707 = vmul.f32 %v699, %v601
    %v708 = vmul.f32 %v700, %v642
    %v709 = vmul.f32 %v701, %v644
    %v710 = vmul.f32 %v702, %v603
    %v711 = vmul.f32 %v703, %v605
    %v712 = vmul.f32 %v704, %v646
    %v713 = vmul.f32 %v705, %v648
    %v714 = vld [vmem:[#allocation2] sm:$0xff]
    %v715 = vld [vmem:[#allocation2 + $0x8] sm:$0xff]
    %v716 = vpack.c.bf16 %v710, %v706
    %v717 = vpack.c.bf16 %v711, %v707
    %v718 = vpack.c.bf16 %v712, %v708
    %v719 = vpack.c.bf16 %v713, %v709
    %v720 = vld [vmem:[#allocation9] sm:$0xf]
    %v721 = vld [vmem:[#allocation9 + $0x4] sm:$0xf]
    %v722 = vld [vmem:[#allocation9 + $0x8] sm:$0xf]
    %v723 = vld [vmem:[#allocation9 + $0xc] sm:$0xf]
    %v724 = vld [vmem:[#allocation9 + $0x10] sm:$0xf]
    %v725 = vld [vmem:[#allocation9 + $0x14] sm:$0xf]
    %v726 = vld [vmem:[#allocation9 + $0x18] sm:$0xf]
    %v727 = vld [vmem:[#allocation9 + $0x1c] sm:$0xf]
    %v728 = vld [vmem:[#allocation9 + $0x20] sm:$0xf]
    %v729 = vld [vmem:[#allocation9 + $0x24] sm:$0xf]
    %v730 = vld [vmem:[#allocation9 + $0x28] sm:$0xf]
    %v731 = vld [vmem:[#allocation9 + $0x2c] sm:$0xf]
    %v732 = vld [vmem:[#allocation9 + $0x30] sm:$0xf]
    %v733 = vld [vmem:[#allocation9 + $0x34] sm:$0xf]
    %v734 = vld [vmem:[#allocation9 + $0x38] sm:$0xf]
    %v735 = vld [vmem:[#allocation9 + $0x3c] sm:$0xf]
    %v736 = vld [vmem:[#allocation9 + $0x40] sm:$0xf]
    %v737 = vld [vmem:[#allocation9 + $0x44] sm:$0xf]
    %v738 = vld [vmem:[#allocation9 + $0x48] sm:$0xf]
    %v739 = vld [vmem:[#allocation9 + $0x4c] sm:$0xf]
    %v740 = vld [vmem:[#allocation9 + $0x50] sm:$0xf]
    %v741 = vld [vmem:[#allocation9 + $0x54] sm:$0xf]
    %v742 = vld [vmem:[#allocation9 + $0x58] sm:$0xf]
    %v743 = vld [vmem:[#allocation9 + $0x5c] sm:$0xf]
    %v744 = vld [vmem:[#allocation9 + $0x60] sm:$0xf]
    %v745 = vld [vmem:[#allocation9 + $0x64] sm:$0xf]
    %v746 = vld [vmem:[#allocation9 + $0x68] sm:$0xf]
    %v747 = vld [vmem:[#allocation9 + $0x6c] sm:$0xf]
    %v748 = vld [vmem:[#allocation9 + $0x70] sm:$0xf]
    %v749 = vld [vmem:[#allocation9 + $0x74] sm:$0xf]
    %v750 = vld [vmem:[#allocation9 + $0x78] sm:$0xf]
    %v751 = vld [vmem:[#allocation9 + $0x7c] sm:$0xf]
    %v752 = vld [vmem:[#allocation9 + $0x80] sm:$0xf]
    %v753 = vld [vmem:[#allocation9 + $0x84] sm:$0xf]
    %v754 = vld [vmem:[#allocation9 + $0x88] sm:$0xf]
    %v755 = vld [vmem:[#allocation9 + $0x8c] sm:$0xf]
    %v756 = vld [vmem:[#allocation9 + $0x90] sm:$0xf]
    %v757 = vld [vmem:[#allocation9 + $0x94] sm:$0xf]
    %v758 = vld [vmem:[#allocation9 + $0x98] sm:$0xf]
    %v759 = vld [vmem:[#allocation9 + $0x9c] sm:$0xf]
    %v760 = vld [vmem:[#allocation9 + $0xa0] sm:$0xf]
    %v761 = vld [vmem:[#allocation9 + $0xa4] sm:$0xf]
    %v762 = vld [vmem:[#allocation9 + $0xa8] sm:$0xf]
    %v763 = vld [vmem:[#allocation9 + $0xac] sm:$0xf]
    %v764 = vld [vmem:[#allocation9 + $0xb0] sm:$0xf]
    %v765 = vld [vmem:[#allocation9 + $0xb4] sm:$0xf]
    %v766 = vld [vmem:[#allocation9 + $0xb8] sm:$0xf]
    %v767 = vld [vmem:[#allocation9 + $0xbc] sm:$0xf]
    %v768 = vld [vmem:[#allocation9 + $0xc0] sm:$0xf]
    %v769 = vld [vmem:[#allocation9 + $0xc4] sm:$0xf]
    %v770 = vld [vmem:[#allocation9 + $0xc8] sm:$0xf]
    %v771 = vld [vmem:[#allocation9 + $0xcc] sm:$0xf]
    %v772 = vld [vmem:[#allocation9 + $0xd0] sm:$0xf]
    %v773 = vld [vmem:[#allocation9 + $0xd4] sm:$0xf]
    %v774 = vld [vmem:[#allocation9 + $0xd8] sm:$0xf]
    %v775 = vld [vmem:[#allocation9 + $0xdc] sm:$0xf]
    %v776 = vld [vmem:[#allocation9 + $0xe0] sm:$0xf]
    %v777 = vld [vmem:[#allocation9 + $0xe4] sm:$0xf]
    %v778 = vld [vmem:[#allocation9 + $0xe8] sm:$0xf]
    %v779 = vld [vmem:[#allocation9 + $0xec] sm:$0xf]
    %v780 = vld [vmem:[#allocation9 + $0xf0] sm:$0xf]
    %v781 = vld [vmem:[#allocation9 + $0xf4] sm:$0xf]
    %v782 = vld [vmem:[#allocation9 + $0xf8] sm:$0xf]
    %v783 = vld [vmem:[#allocation9 + $0xfc] sm:$0xf]
    %v848 = vunpack.c.l.b16 %v720
    %v849 = vunpack.c.l.b16 %v721
    %v850 = vunpack.c.l.b16 %v722
    %v851 = vunpack.c.l.b16 %v723
    %v852 = vunpack.c.l.b16 %v724
    %v853 = vunpack.c.l.b16 %v725
    %v854 = vunpack.c.l.b16 %v726
    %v855 = vunpack.c.l.b16 %v727
    %v856 = vunpack.c.l.b16 %v728
    %v857 = vunpack.c.l.b16 %v729
    %v858 = vunpack.c.l.b16 %v730
    %v859 = vunpack.c.l.b16 %v731
    %v860 = vunpack.c.l.b16 %v732
    %v861 = vunpack.c.l.b16 %v733
    %v862 = vunpack.c.l.b16 %v734
    %v863 = vunpack.c.l.b16 %v735
    %v864 = vunpack.c.l.b16 %v736
    %v865 = vunpack.c.l.b16 %v737
    %v866 = vunpack.c.l.b16 %v738
    %v867 = vunpack.c.l.b16 %v739
    %v868 = vunpack.c.l.b16 %v740
    %v869 = vunpack.c.l.b16 %v741
    %v870 = vunpack.c.l.b16 %v742
    %v871 = vunpack.c.l.b16 %v743
    %v872 = vunpack.c.l.b16 %v744
    %v873 = vunpack.c.l.b16 %v745
    %v874 = vunpack.c.l.b16 %v746
    %v875 = vunpack.c.l.b16 %v747
    %v876 = vunpack.c.l.b16 %v748
    %v877 = vunpack.c.l.b16 %v749
    %v878 = vunpack.c.l.b16 %v750
    %v879 = vunpack.c.l.b16 %v751
    %v880 = vunpack.c.l.b16 %v752
    %v881 = vunpack.c.l.b16 %v753
    %v882 = vunpack.c.l.b16 %v754
    %v883 = vunpack.c.l.b16 %v755
    %v884 = vunpack.c.l.b16 %v756
    %v885 = vunpack.c.l.b16 %v757
    %v886 = vunpack.c.l.b16 %v758
    %v887 = vunpack.c.l.b16 %v759
    %v888 = vunpack.c.l.b16 %v760
    %v889 = vunpack.c.l.b16 %v761
    %v890 = vunpack.c.l.b16 %v762
    %v891 = vunpack.c.l.b16 %v763
    %v892 = vunpack.c.l.b16 %v764
    %v893 = vunpack.c.l.b16 %v765
    %v894 = vunpack.c.l.b16 %v766
    %v895 = vunpack.c.l.b16 %v767
    %v896 = vunpack.c.l.b16 %v768
    %v897 = vunpack.c.l.b16 %v769
    %v898 = vunpack.c.l.b16 %v770
    %v899 = vunpack.c.l.b16 %v771
    %v900 = vunpack.c.l.b16 %v772
    %v901 = vunpack.c.l.b16 %v773
    %v902 = vunpack.c.l.b16 %v774
    %v903 = vunpack.c.l.b16 %v775
    %v904 = vunpack.c.l.b16 %v776
    %v905 = vunpack.c.l.b16 %v777
    %v906 = vunpack.c.l.b16 %v778
    %v907 = vunpack.c.l.b16 %v779
    %v908 = vunpack.c.l.b16 %v780
    %v909 = vunpack.c.l.b16 %v781
    %v910 = vunpack.c.l.b16 %v782
    %v911 = vunpack.c.l.b16 %v783
    %v912 = vpack.c.b16 %v849, %v848
    %v913 = vpack.c.b16 %v851, %v850
    %v914 = vpack.c.b16 %v853, %v852
    %v915 = vpack.c.b16 %v855, %v854
    %v916 = vpack.c.b16 %v857, %v856
    %v917 = vpack.c.b16 %v859, %v858
    %v918 = vpack.c.b16 %v861, %v860
    %v919 = vpack.c.b16 %v863, %v862
    %v920 = vpack.c.b16 %v865, %v864
    %v921 = vpack.c.b16 %v867, %v866
    %v922 = vpack.c.b16 %v869, %v868
    %v923 = vpack.c.b16 %v871, %v870
    %v924 = vpack.c.b16 %v873, %v872
    %v925 = vpack.c.b16 %v875, %v874
    %v926 = vpack.c.b16 %v877, %v876
    %v927 = vpack.c.b16 %v879, %v878
    %v928 = vpack.c.b16 %v881, %v880
    %v929 = vpack.c.b16 %v883, %v882
    %v930 = vpack.c.b16 %v885, %v884
    %v931 = vpack.c.b16 %v887, %v886
    %v932 = vpack.c.b16 %v889, %v888
    %v933 = vpack.c.b16 %v891, %v890
    %v934 = vpack.c.b16 %v893, %v892
    %v935 = vpack.c.b16 %v895, %v894
    %v936 = vpack.c.b16 %v897, %v896
    %v937 = vpack.c.b16 %v899, %v898
    %v938 = vpack.c.b16 %v901, %v900
    %v939 = vpack.c.b16 %v903, %v902
    %v940 = vpack.c.b16 %v905, %v904
    %v941 = vpack.c.b16 %v907, %v906
    %v942 = vpack.c.b16 %v909, %v908
    %v943 = vpack.c.b16 %v911, %v910
    %976 = vmatprep.subr.bf16.mxu0 0
    %977 = vmatpush1.bf16.msra.mxu0 %v919
    %978 = vmatprep.subr.bf16.mxu0 0
    %979 = vmatpush1.bf16.msra.mxu0 %v918
    %980 = vmatprep.subr.bf16.mxu0 0
    %981 = vmatpush1.bf16.msra.mxu0 %v917
    %982 = vmatprep.subr.bf16.mxu0 0
    %983 = vmatpush1.bf16.msra.mxu0 %v916
    %984 = vmatprep.subr.bf16.mxu0 0
    %985 = vmatpush1.bf16.msra.mxu0 %v915
    %986 = vmatprep.subr.bf16.mxu0 0
    %987 = vmatpush1.bf16.msra.mxu0 %v914
    %988 = vmatprep.subr.bf16.mxu0 0
    %989 = vmatpush1.bf16.msra.mxu0 %v913
    %990 = vmatprep.subr.bf16.mxu0 0
    %991 = vmatpush1.bf16.msra.mxu0 %v912
    %992 = vmatprep.subr.bf16.mxu0 0
    %993 = vmatpush2.bf16.msra.mxu0 %v927
    %994 = vmatprep.subr.bf16.mxu0 0
    %995 = vmatpush2.bf16.msra.mxu0 %v926
    %996 = vmatprep.subr.bf16.mxu0 0
    %997 = vmatpush2.bf16.msra.mxu0 %v925
    %998 = vmatprep.subr.bf16.mxu0 0
    %999 = vmatpush2.bf16.msra.mxu0 %v924
    %1000 = vmatprep.subr.bf16.mxu0 0
    %1001 = vmatpush2.bf16.msra.mxu0 %v923
    %1002 = vmatprep.subr.bf16.mxu0 0
    %1003 = vmatpush2.bf16.msra.mxu0 %v922
    %1004 = vmatprep.subr.bf16.mxu0 0
    %1005 = vmatpush2.bf16.msra.mxu0 %v921
    %1006 = vmatprep.subr.bf16.mxu0 0
    %1007 = vmatpush2.bf16.msra.mxu0 %v920
    %1008 = vmatprep.mubr.bf16.mxu0 %v717
    %1009 = vmatmul.mubr.bf16.gmra.mxu0 %v716
    %v1010 = vpop.f32.mrf.mxu0
    %v1011 = vadd.f32 0.0, %v1010
    %v1012 = vpop.f32.mrf.mxu0
    %v1013 = vpop.f32.mrf.mxu0
    %v1014 = vadd.f32 0.0, %v1013
    %v1015 = vpop.f32.mrf.mxu0
    %1016 = vdwg.mxu0
    %1017 = vmatprep.subr.bf16.mxu0 0
    %1018 = vmatpush1.bf16.msra.mxu0 %v935
    %1019 = vmatprep.subr.bf16.mxu0 0
    %1020 = vmatpush1.bf16.msra.mxu0 %v934
    %1021 = vmatprep.subr.bf16.mxu0 0
    %1022 = vmatpush1.bf16.msra.mxu0 %v933
    %1023 = vmatprep.subr.bf16.mxu0 0
    %1024 = vmatpush1.bf16.msra.mxu0 %v932
    %1025 = vmatprep.subr.bf16.mxu0 0
    %1026 = vmatpush1.bf16.msra.mxu0 %v931
    %1027 = vmatprep.subr.bf16.mxu0 0
    %1028 = vmatpush1.bf16.msra.mxu0 %v930
    %1029 = vmatprep.subr.bf16.mxu0 0
    %1030 = vmatpush1.bf16.msra.mxu0 %v929
    %1031 = vmatprep.subr.bf16.mxu0 0
    %1032 = vmatpush1.bf16.msra.mxu0 %v928
    %1033 = vmatprep.subr.bf16.mxu0 0
    %1034 = vmatpush2.bf16.msra.mxu0 %v943
    %1035 = vmatprep.subr.bf16.mxu0 0
    %1036 = vmatpush2.bf16.msra.mxu0 %v942
    %1037 = vmatprep.subr.bf16.mxu0 0
    %1038 = vmatpush2.bf16.msra.mxu0 %v941
    %1039 = vmatprep.subr.bf16.mxu0 0
    %1040 = vmatpush2.bf16.msra.mxu0 %v940
    %1041 = vmatprep.subr.bf16.mxu0 0
    %1042 = vmatpush2.bf16.msra.mxu0 %v939
    %1043 = vmatprep.subr.bf16.mxu0 0
    %1044 = vmatpush2.bf16.msra.mxu0 %v938
    %1045 = vmatprep.subr.bf16.mxu0 0
    %1046 = vmatpush2.bf16.msra.mxu0 %v937
    %1047 = vmatprep.subr.bf16.mxu0 0
    %1048 = vmatpush2.bf16.msra.mxu0 %v936
    %1049 = vmatprep.mubr.bf16.mxu0 %v719
    %1050 = vmatmul.mubr.bf16.gmra.mxu0 %v718
    %v1051 = vpop.f32.mrf.mxu0
    %v1052 = vadd.f32 %v1011, %v1051
    %v1053 = vpop.f32.mrf.mxu0
    %v1054 = vpop.f32.mrf.mxu0
    %v1055 = vadd.f32 %v1014, %v1054
    %v1056 = vpop.f32.mrf.mxu0
    %1057 = vdwg.mxu0
    %v1058 = vadd.f32 %v714, %v1052
    %v1059 = vadd.f32 %v715, %v1055
    %1060 = vst [vmem:[#allocation2] sm:$0xff] %v1058
    %1061 = vst [vmem:[#allocation2 + $0x8] sm:$0xff] %v1059
    // Predicated region
    $region38: #{tpu_custom_call.1} parent=1 // pred_check
      %p1062 = pneg %p80
    $region39: #{tpu_custom_call.1} parent=1 // pred_check_branch
      %1064 = sbr.rel (%p1062) target = $region41
    $region40: #{tpu_custom_call.1} parent=1 // pred_region
      %v1065 = vld [vmem:[#allocation2] sm:$0xff]
      %v1066 = vld [vmem:[#allocation2 + $0x8] sm:$0xff]
      %v1067 = vpack.c.bf16 %v1066, %v1065
      %v1069 = vunpack.c.l.b16 %v1067
      %v1070 = vunpack.c.h.b16 %v1067
      %v1071 = vpack.c.b16 %v1069, %v1069
      %v1072 = vpack.c.b16 %v1070, %v1070
      %1075 = vst [vmem:[#allocation11] sm:$0xf] %v1071
      %1076 = vst [vmem:[#allocation11 + $0x4] sm:$0xf] %v1072
    $region41: #{tpu_custom_call.1} parent=1 // pred_fallthru
      _
    // Predicated region
    $region42: #{tpu_custom_call.1} parent=1 // pred_check
      _
    $region43: #{tpu_custom_call.1} parent=1 // pred_check_branch
      %1078 = sbr.rel (0) target = $region45
    $region44: #{tpu_custom_call.1} parent=1 // pred_region
      %s1080 = ssub.s32 128, 128
      %1081 = vsyncadd [#allocation5], %s1080
      %s1082 = sshll.u32 [#allocation11], 4
      %s1083 = int_to_ptr.vmem [resolvable:$true] %s1082
      %1088 = dma.vmem_to_hbm [thread:$0]  %s1083, 128, %s4, [#allocation5], 64, 64, 4
    $region45: #{tpu_custom_call.1} parent=1 // pred_fallthru
      _
    // Predicated region
    $region46: #{tpu_custom_call.1} parent=1 // pred_check
      _
    $region47: #{tpu_custom_call.1} parent=1 // pred_check_branch
      %1090 = sbr.rel (0) target = $region49
    $region48: #{tpu_custom_call.1} parent=1 // pred_region
      %1091 = dma.done [#allocation5], 128
    $region49: #{tpu_custom_call.1} parent=1 // pred_fallthru
      _
    %1092 = vsyncpa [#allocation4], 1
    %1093 = vsyncpa [#allocation7], 1
    %1094 = vsyncpa [#allocation10], 1
    %1095 = vsyncpa [#allocation5], 1

</llo_original>
